<compile_context>
chip_gen: v7x
topology: tpu7x:2x2x1
jax: 0.10.0
libtpu: 0.0.40
codegen_flags: <defaults>
</compile_context>

<pallas_src>
import functools

import jax
import jax.numpy as jnp
from jax.experimental import pallas as pl
from jax.experimental.pallas import tpu as pltpu

_LANE = 128
_SUBLANE = 8


def _round_up(v, m):
    return (v + m - 1) // m * m


def _forest_kernel(x_ref, w_ref, bsum_ref, o_ref, *, n_trees, o_group):
    # One fused matmul over all trees: (Bt, Dp) @ (Dp, T*Og) -> (Bt, T*Og), f32 acc.
    s = jnp.dot(x_ref[...], w_ref[...], preferred_element_type=jnp.float32)
    # Reduce the T per-tree column groups (static, 128-lane-aligned slices).
    acc = s[:, 0:o_group]
    for t in range(1, n_trees):
        acc = acc + s[:, t * o_group:(t + 1) * o_group]
    # Add summed bias once, average over trees, single lane-dense store.
    o_ref[...] = ((acc + bsum_ref[...]) * (1.0 / n_trees)).astype(o_ref.dtype)


def random_forest_forward(x, W, b):
    """x: (B, D) f32, W: (T, D, O) f32, b: (T, O) f32 -> (B, O) f32."""
    T, D, O = W.shape
    B = x.shape[0]

    # Lane/sublane-aligned padded sizes (pad at array creation, not per-block).
    Dp = _round_up(D, _LANE)                 # K dim -> multiple of 128
    Og = _round_up(O, _LANE)                 # per-tree output -> 128 lanes
    Bt = min(_round_up(B, _SUBLANE), 256)    # batch tile (rows of the matmul)
    Bp = _round_up(B, Bt)
    n_batch_tiles = Bp // Bt

    # bf16 operands for the MXU; zero padding keeps semantics exact.
    x_p = jnp.zeros((Bp, Dp), jnp.bfloat16).at[:B, :D].set(x.astype(jnp.bfloat16))

    # Pack all trees along N: tree t occupies columns [t*Og, t*Og + O).
    W_bf = jnp.pad(W.astype(jnp.bfloat16), ((0, 0), (0, 0), (0, Og - O)))  # (T, D, Og)
    w_all = jnp.zeros((Dp, T * Og), jnp.bfloat16).at[:D, :].set(
        W_bf.transpose(1, 0, 2).reshape(D, T * Og)
    )

    # Summed bias, added once in the kernel finalize (f32).
    b_sum = jnp.zeros((1, Og), jnp.float32).at[0, :O].set(jnp.sum(b, axis=0))

    kernel = functools.partial(_forest_kernel, n_trees=T, o_group=Og)

    out_padded = pl.pallas_call(
        kernel,
        out_shape=jax.ShapeDtypeStruct((Bp, Og), jnp.float32),
        grid_spec=pltpu.PrefetchScalarGridSpec(
            num_scalar_prefetch=0,
            grid=(n_batch_tiles,),  # batch tiles only; tree loop is fused away
            in_specs=[
                pl.BlockSpec((Bt, Dp), lambda i: (i, 0)),        # x tile
                pl.BlockSpec((Dp, T * Og), lambda i: (0, 0)),    # all trees' weights
                pl.BlockSpec((1, Og), lambda i: (0, 0)),         # summed bias
            ],
            out_specs=pl.BlockSpec((Bt, Og), lambda i: (i, 0)),  # lane-dense output
        ),
        compiler_params=pltpu.CompilerParams(
            dimension_semantics=("parallel",),  # batch tiles split across TCs (v7x)
        ),
    )(x_p, w_all, b_sum)

    return out_padded[:B, :O]


if __name__ == "__main__":
    B, D, O, T = 8, 32, 16, 4  # batch, features, tree output dim, num trees

    key = jax.random.PRNGKey(0)
    kx, kw, kb = jax.random.split(key, 3)
    x = jax.random.normal(kx, (B, D), dtype=jnp.float32)
    W = jax.random.normal(kw, (T, D, O), dtype=jnp.float32) * 0.1
    b = jax.random.normal(kb, (T, O), dtype=jnp.float32) * 0.1

    out = random_forest_forward(x, W, b)
    out = jax.block_until_ready(out)

    # bf16-consistent pure-JAX reference of the same RandomForest forward.
    xr = x.astype(jnp.bfloat16).astype(jnp.float32)
    Wr = W.astype(jnp.bfloat16).astype(jnp.float32)
    ref = jnp.mean(jnp.einsum("bd,tdo->tbo", xr, Wr) + b[:, None, :], axis=0)

    assert out.shape == (B, O)
    assert jnp.allclose(out, ref, atol=1e-3, rtol=1e-3)

    print("KERNEL_OK")
</pallas_src>

<mosaic_0001>
module attributes {stable_mosaic.version = 11 : i64} {
  func.func @_forest_kernel(%arg0: i32, %arg1: memref<8x128xbf16, #tpu.memory_space<vmem>>, %arg2: memref<128x512xbf16, #tpu.memory_space<vmem>>, %arg3: memref<1x128xf32, #tpu.memory_space<vmem>>, %arg4: memref<8x128xf32, #tpu.memory_space<vmem>>) attributes {dimension_semantics = [#tpu.dimension_semantics<parallel>], iteration_bounds = array<i64: 1>, scalar_prefetch = 0 : i64, scratch_operands = 0 : i64, tpu.core_type = #tpu.core_type<tc>, window_params = [{transform_indices = @transform_0, window_bounds = array<i64: 8, 128>}, {pipeline_mode = #tpu.pipeline_mode<synchronous>, transform_indices = @transform_1, window_bounds = array<i64: 128, 512>}, {pipeline_mode = #tpu.pipeline_mode<synchronous>, transform_indices = @transform_2, window_bounds = array<i64: 1, 128>}, {transform_indices = @transform_3, window_bounds = array<i64: 8, 128>}]} {
    %c0 = arith.constant 0 : index
    %c0_0 = arith.constant 0 : index
    %0 = vector.load %arg1[%c0, %c0_0] : memref<8x128xbf16, #tpu.memory_space<vmem>>, vector<8x128xbf16>
    %c0_1 = arith.constant 0 : index
    %c0_2 = arith.constant 0 : index
    %1 = vector.load %arg2[%c0_1, %c0_2] : memref<128x512xbf16, #tpu.memory_space<vmem>>, vector<128x512xbf16>
    %cst = arith.constant dense<0.000000e+00> : vector<8x512xf32>
    %2 = tpu.matmul %0, %1, %cst {dimension_numbers = #tpu.dot_dimension_numbers<[1], [0], [0], [1], [0, 0, 1, 1], [], []>} : vector<8x128xbf16>, vector<128x512xbf16>, vector<8x512xf32> -> vector<8x512xf32>
    %3 = vector.extract_strided_slice %2 {offsets = [0, 0], sizes = [8, 128], strides = [1, 1]} : vector<8x512xf32> to vector<8x128xf32>
    %4 = vector.extract_strided_slice %2 {offsets = [0, 128], sizes = [8, 128], strides = [1, 1]} : vector<8x512xf32> to vector<8x128xf32>
    %5 = arith.addf %3, %4 : vector<8x128xf32>
    %6 = vector.extract_strided_slice %2 {offsets = [0, 256], sizes = [8, 128], strides = [1, 1]} : vector<8x512xf32> to vector<8x128xf32>
    %7 = arith.addf %5, %6 : vector<8x128xf32>
    %8 = vector.extract_strided_slice %2 {offsets = [0, 384], sizes = [8, 128], strides = [1, 1]} : vector<8x512xf32> to vector<8x128xf32>
    %9 = arith.addf %7, %8 : vector<8x128xf32>
    %c0_3 = arith.constant 0 : index
    %c0_4 = arith.constant 0 : index
    %10 = vector.load %arg3[%c0_3, %c0_4] : memref<1x128xf32, #tpu.memory_space<vmem>>, vector<1x128xf32>
    %11 = vector.broadcast %10 : vector<1x128xf32> to vector<8x128xf32>
    %12 = arith.addf %9, %11 : vector<8x128xf32>
    %cst_5 = arith.constant 2.500000e-01 : f32
    %13 = vector.broadcast %cst_5 : f32 to vector<8x128xf32>
    %14 = arith.mulf %12, %13 : vector<8x128xf32>
    %c0_6 = arith.constant 0 : index
    %c0_7 = arith.constant 0 : index
    %15 = vector.load %arg4[%c0_6, %c0_7] : memref<8x128xf32, #tpu.memory_space<vmem>>, vector<8x128xf32>
    tpu.vector_store %arg4[%c0_6, %c0_7], %14 {strides = array<i32>} : memref<8x128xf32, #tpu.memory_space<vmem>>, vector<8x128xf32>,
    return
  }
  func.func @transform_0(%arg0: i32) -> (i32, i32) {
    %c0_i32 = arith.constant 0 : i32
    %c0_i32_0 = arith.constant 0 : i32
    return %arg0, %c0_i32 : i32, i32
  }
  func.func @transform_1(%arg0: i32) -> (i32, i32) {
    %c0_i32 = arith.constant 0 : i32
    %c0_i32_0 = arith.constant 0 : i32
    %c0_i32_1 = arith.constant 0 : i32
    return %c0_i32, %c0_i32_0 : i32, i32
  }
  func.func @transform_2(%arg0: i32) -> (i32, i32) {
    %c0_i32 = arith.constant 0 : i32
    %c0_i32_0 = arith.constant 0 : i32
    %c0_i32_1 = arith.constant 0 : i32
    return %c0_i32, %c0_i32_0 : i32, i32
  }
  func.func @transform_3(%arg0: i32) -> (i32, i32) {
    %c0_i32 = arith.constant 0 : i32
    %c0_i32_0 = arith.constant 0 : i32
    return %arg0, %c0_i32 : i32, i32
  }
}

</mosaic_0001>

<llo_original>
// kernel: tpu_custom_call.1
$region0: #{tpu_custom_call.1}
  #allocation0 [shape = 'u32[]', space=smem, size = 0x4, offset = 0x4, fixed_abs, tag = 'smem constant byte address 0x4 - core index']
  #allocation1 [shape = 'u32[144,128]{1,0:T(1,128)}', space=vmem, size = 0x12000, scoped, tag = 'internal scratch']
  %s0 = inlined_call_operand.hbm [shape: bf16[8,128], index: 0, kind: input, shape index: {}]
  %s1 = inlined_call_operand.hbm [shape: bf16[128,512], index: 1, kind: input, shape index: {}]
  %s2 = inlined_call_operand.vmem [shape: f32[1,128], index: 2, kind: input, shape index: {}]
  %s3 = inlined_call_operand.hbm [shape: f32[8,128], index: 3, kind: output, shape index: {}]
  %s4 = sld [smem:[#allocation0]]
  $region30: #{tpu_custom_call.1} parent=0
    _
  %s6 = ssub.s32 1, %s4
  %s7 = scalar_select 0, %s6, %s4
  $region1: #{tpu_custom_call.1} parent=0
    #allocation2 [shape = 'u8[2048]{0}', space=vmem, size = 0x800, scoped, tag = 'input window, operand 0, single buffered']
    #allocation3 [shape = 's32[1]{0}', space=sflag, size = 0x4, scoped, tag = 'scoped memory for tpu_custom_call.1']
    #allocation4 [shape = 's32[1]{0}', space=sflag, size = 0x4, scoped, tag = 'scoped memory for tpu_custom_call.1']
    #allocation5 [shape = 'u8[131072]{0}', space=vmem, size = 0x20000, scoped, tag = 'input window, operand 1, single buffered']
    #allocation6 [shape = 's32[1]{0}', space=sflag, size = 0x4, scoped, tag = 'scoped memory for tpu_custom_call.1']
    #allocation7 [shape = 'u8[4096]{0}', space=vmem, size = 0x1000, scoped, tag = 'output window, operand 0, single buffered']
    %8 = vsyncpa [#allocation3], 0
    %9 = vsyncpa [#allocation6], 0
    %10 = vsyncpa [#allocation4], 0
    // Predicated region
    $region2: #{tpu_custom_call.1} parent=1 // pred_check
      _
    $region3: #{tpu_custom_call.1} parent=1 // pred_check_branch
      %12 = sbr.rel (0) target = $region5
    $region4: #{tpu_custom_call.1} parent=1 // pred_region
      %s14 = ssub.s32 64, 64
      %15 = vsyncadd [#allocation3], %s14
      %s17 = sshll.u32 [#allocation2], 4
      %s18 = int_to_ptr.vmem [resolvable:$true] %s17
      %20 = dma.hbm_to_vmem [thread:$0]  %s0, 64, %s18, [#allocation3]
    $region5: #{tpu_custom_call.1} parent=1 // pred_fallthru
      _
    // Predicated region
    $region6: #{tpu_custom_call.1} parent=1 // pred_check
      _
    $region7: #{tpu_custom_call.1} parent=1 // pred_check_branch
      %22 = sbr.rel (0) target = $region9
    $region8: #{tpu_custom_call.1} parent=1 // pred_region
      %s24 = ssub.s32 4096, 4096
      %25 = vsyncadd [#allocation6], %s24
      %s26 = sshll.u32 [#allocation5], 4
      %s27 = int_to_ptr.vmem [resolvable:$true] %s26
      %32 = dma.hbm_to_vmem [thread:$0]  %s1, 4096, %s27, [#allocation6], 256, 256, 16
    $region9: #{tpu_custom_call.1} parent=1 // pred_fallthru
      _
    // Predicated region
    $region10: #{tpu_custom_call.1} parent=1 // pred_check
      _
    $region11: #{tpu_custom_call.1} parent=1 // pred_check_branch
      %34 = sbr.rel (0) target = $region13
    $region12: #{tpu_custom_call.1} parent=1 // pred_region
      _
    $region13: #{tpu_custom_call.1} parent=1 // pred_fallthru
      _
    // Predicated region
    $region14: #{tpu_custom_call.1} parent=1 // pred_check
      _
    $region15: #{tpu_custom_call.1} parent=1 // pred_check_branch
      %36 = sbr.rel (0) target = $region17
    $region16: #{tpu_custom_call.1} parent=1 // pred_region
      %37 = dma.done [#allocation3], 64
    $region17: #{tpu_custom_call.1} parent=1 // pred_fallthru
      _
    // Predicated region
    $region18: #{tpu_custom_call.1} parent=1 // pred_check
      _
    $region19: #{tpu_custom_call.1} parent=1 // pred_check_branch
      %39 = sbr.rel (0) target = $region21
    $region20: #{tpu_custom_call.1} parent=1 // pred_region
      %40 = dma.done [#allocation6], 4096
    $region21: #{tpu_custom_call.1} parent=1 // pred_fallthru
      _
    %v42 = vld [vmem:[#allocation2] sm:$0xf]
    %v43 = vld [vmem:[#allocation5] sm:$0xff]
    %v44 = vld [vmem:[#allocation5 + $0x8] sm:$0xff]
    %v45 = vld [vmem:[#allocation5 + $0x10] sm:$0xff]
    %v46 = vld [vmem:[#allocation5 + $0x18] sm:$0xff]
    %v47 = vld [vmem:[#allocation5 + $0x20] sm:$0xff]
    %v48 = vld [vmem:[#allocation5 + $0x28] sm:$0xff]
    %v49 = vld [vmem:[#allocation5 + $0x30] sm:$0xff]
    %v50 = vld [vmem:[#allocation5 + $0x38] sm:$0xff]
    %v51 = vld [vmem:[#allocation5 + $0x40] sm:$0xff]
    %v52 = vld [vmem:[#allocation5 + $0x48] sm:$0xff]
    %v53 = vld [vmem:[#allocation5 + $0x50] sm:$0xff]
    %v54 = vld [vmem:[#allocation5 + $0x58] sm:$0xff]
    %v55 = vld [vmem:[#allocation5 + $0x60] sm:$0xff]
    %v56 = vld [vmem:[#allocation5 + $0x68] sm:$0xff]
    %v57 = vld [vmem:[#allocation5 + $0x70] sm:$0xff]
    %v58 = vld [vmem:[#allocation5 + $0x78] sm:$0xff]
    %v59 = vld [vmem:[#allocation5 + $0x80] sm:$0xff]
    %v60 = vld [vmem:[#allocation5 + $0x88] sm:$0xff]
    %v61 = vld [vmem:[#allocation5 + $0x90] sm:$0xff]
    %v62 = vld [vmem:[#allocation5 + $0x98] sm:$0xff]
    %v63 = vld [vmem:[#allocation5 + $0xa0] sm:$0xff]
    %v64 = vld [vmem:[#allocation5 + $0xa8] sm:$0xff]
    %v65 = vld [vmem:[#allocation5 + $0xb0] sm:$0xff]
    %v66 = vld [vmem:[#allocation5 + $0xb8] sm:$0xff]
    %v67 = vld [vmem:[#allocation5 + $0xc0] sm:$0xff]
    %v68 = vld [vmem:[#allocation5 + $0xc8] sm:$0xff]
    %v69 = vld [vmem:[#allocation5 + $0xd0] sm:$0xff]
    %v70 = vld [vmem:[#allocation5 + $0xd8] sm:$0xff]
    %v71 = vld [vmem:[#allocation5 + $0xe0] sm:$0xff]
    %v72 = vld [vmem:[#allocation5 + $0xe8] sm:$0xff]
    %v73 = vld [vmem:[#allocation5 + $0xf0] sm:$0xff]
    %v74 = vld [vmem:[#allocation5 + $0xf8] sm:$0xff]
    %v107 = vunpack.c.l.b16 %v43
    %v108 = vunpack.c.h.b16 %v43
    %v109 = vunpack.c.l.b16 %v44
    %v110 = vunpack.c.h.b16 %v44
    %v111 = vunpack.c.l.b16 %v45
    %v112 = vunpack.c.h.b16 %v45
    %v113 = vunpack.c.l.b16 %v46
    %v114 = vunpack.c.h.b16 %v46
    %v115 = vunpack.c.l.b16 %v47
    %v116 = vunpack.c.h.b16 %v47
    %v117 = vunpack.c.l.b16 %v48
    %v118 = vunpack.c.h.b16 %v48
    %v119 = vunpack.c.l.b16 %v49
    %v120 = vunpack.c.h.b16 %v49
    %v121 = vunpack.c.l.b16 %v50
    %v122 = vunpack.c.h.b16 %v50
    %v123 = vunpack.c.l.b16 %v51
    %v124 = vunpack.c.h.b16 %v51
    %v125 = vunpack.c.l.b16 %v52
    %v126 = vunpack.c.h.b16 %v52
    %v127 = vunpack.c.l.b16 %v53
    %v128 = vunpack.c.h.b16 %v53
    %v129 = vunpack.c.l.b16 %v54
    %v130 = vunpack.c.h.b16 %v54
    %v131 = vunpack.c.l.b16 %v55
    %v132 = vunpack.c.h.b16 %v55
    %v133 = vunpack.c.l.b16 %v56
    %v134 = vunpack.c.h.b16 %v56
    %v135 = vunpack.c.l.b16 %v57
    %v136 = vunpack.c.h.b16 %v57
    %v137 = vunpack.c.l.b16 %v58
    %v138 = vunpack.c.h.b16 %v58
    %v139 = vunpack.c.l.b16 %v59
    %v140 = vunpack.c.h.b16 %v59
    %v141 = vunpack.c.l.b16 %v60
    %v142 = vunpack.c.h.b16 %v60
    %v143 = vunpack.c.l.b16 %v61
    %v144 = vunpack.c.h.b16 %v61
    %v145 = vunpack.c.l.b16 %v62
    %v146 = vunpack.c.h.b16 %v62
    %v147 = vunpack.c.l.b16 %v63
    %v148 = vunpack.c.h.b16 %v63
    %v149 = vunpack.c.l.b16 %v64
    %v150 = vunpack.c.h.b16 %v64
    %v151 = vunpack.c.l.b16 %v65
    %v152 = vunpack.c.h.b16 %v65
    %v153 = vunpack.c.l.b16 %v66
    %v154 = vunpack.c.h.b16 %v66
    %v155 = vunpack.c.l.b16 %v67
    %v156 = vunpack.c.h.b16 %v67
    %v157 = vunpack.c.l.b16 %v68
    %v158 = vunpack.c.h.b16 %v68
    %v159 = vunpack.c.l.b16 %v69
    %v160 = vunpack.c.h.b16 %v69
    %v161 = vunpack.c.l.b16 %v70
    %v162 = vunpack.c.h.b16 %v70
    %v163 = vunpack.c.l.b16 %v71
    %v164 = vunpack.c.h.b16 %v71
    %v165 = vunpack.c.l.b16 %v72
    %v166 = vunpack.c.h.b16 %v72
    %v167 = vunpack.c.l.b16 %v73
    %v168 = vunpack.c.h.b16 %v73
    %v169 = vunpack.c.l.b16 %v74
    %v170 = vunpack.c.h.b16 %v74
    %v171 = vpack.c.b16 %v111, %v107
    %v172 = vpack.c.b16 %v112, %v108
    %v173 = vpack.c.b16 %v113, %v109
    %v174 = vpack.c.b16 %v114, %v110
    %v175 = vpack.c.b16 %v119, %v115
    %v176 = vpack.c.b16 %v120, %v116
    %v177 = vpack.c.b16 %v121, %v117
    %v178 = vpack.c.b16 %v122, %v118
    %v179 = vpack.c.b16 %v127, %v123
    %v180 = vpack.c.b16 %v128, %v124
    %v181 = vpack.c.b16 %v129, %v125
    %v182 = vpack.c.b16 %v130, %v126
    %v183 = vpack.c.b16 %v135, %v131
    %v184 = vpack.c.b16 %v136, %v132
    %v185 = vpack.c.b16 %v137, %v133
    %v186 = vpack.c.b16 %v138, %v134
    %v187 = vpack.c.b16 %v143, %v139
    %v188 = vpack.c.b16 %v144, %v140
    %v189 = vpack.c.b16 %v145, %v141
    %v190 = vpack.c.b16 %v146, %v142
    %v191 = vpack.c.b16 %v151, %v147
    %v192 = vpack.c.b16 %v152, %v148
    %v193 = vpack.c.b16 %v153, %v149
    %v194 = vpack.c.b16 %v154, %v150
    %v195 = vpack.c.b16 %v159, %v155
    %v196 = vpack.c.b16 %v160, %v156
    %v197 = vpack.c.b16 %v161, %v157
    %v198 = vpack.c.b16 %v162, %v158
    %v199 = vpack.c.b16 %v167, %v163
    %v200 = vpack.c.b16 %v168, %v164
    %v201 = vpack.c.b16 %v169, %v165
    %v202 = vpack.c.b16 %v170, %v166
    %235 = vmatprep.subr.bf16.mxu0 %v172
    %236 = vmatpush1.bf16.msra.mxu0 %v171
    %237 = vmatprep.subr.bf16.mxu0 %v176
    %238 = vmatpush1.bf16.msra.mxu0 %v175
    %239 = vmatprep.subr.bf16.mxu0 %v180
    %240 = vmatpush1.bf16.msra.mxu0 %v179
    %241 = vmatprep.subr.bf16.mxu0 %v184
    %242 = vmatpush1.bf16.msra.mxu0 %v183
    %243 = vmatprep.subr.bf16.mxu0 %v188
    %244 = vmatpush1.bf16.msra.mxu0 %v187
    %245 = vmatprep.subr.bf16.mxu0 %v192
    %246 = vmatpush1.bf16.msra.mxu0 %v191
    %247 = vmatprep.subr.bf16.mxu0 %v196
    %248 = vmatpush1.bf16.msra.mxu0 %v195
    %249 = vmatprep.subr.bf16.mxu0 %v200
    %250 = vmatpush1.bf16.msra.mxu0 %v199
    %251 = vmatprep.subr.bf16.mxu0 0
    %252 = vmatpush1.bf16.msra.mxu0 0
    %253 = vmatprep.subr.bf16.mxu0 0
    %254 = vmatpush1.bf16.msra.mxu0 0
    %255 = vmatprep.subr.bf16.mxu0 0
    %256 = vmatpush1.bf16.msra.mxu0 0
    %257 = vmatprep.subr.bf16.mxu0 0
    %258 = vmatpush1.bf16.msra.mxu0 0
    %259 = vmatprep.subr.bf16.mxu0 0
    %260 = vmatpush1.bf16.msra.mxu0 0
    %261 = vmatprep.subr.bf16.mxu0 0
    %262 = vmatpush1.bf16.msra.mxu0 0
    %263 = vmatprep.subr.bf16.mxu0 0
    %264 = vmatpush1.bf16.msra.mxu0 0
    %265 = vmatprep.subr.bf16.mxu0 0
    %266 = vmatpush1.bf16.msra.mxu0 0
    %267 = vmatprep.mubr.bf16.mxu0 0
    %268 = vmatmul.mubr.bf16.gmra.mrb[0].mxu0 %v42
    %v269 = vpop.f32.mrb[0].mxu0
    %v270 = vadd.f32 0.0, %v269
    %v271 = vpop.f32.mrb[0].mxu0
    %v272 = vadd.f32 0.0, %v271
    %v273 = vpop.f32.mrb[0].mxu0
    %v274 = vpop.f32.mrb[0].mxu0
    %275 = vdwg.mxu0
    %276 = vmatprep.subr.bf16.mxu0 %v174
    %277 = vmatpush1.bf16.msra.mxu0 %v173
    %278 = vmatprep.subr.bf16.mxu0 %v178
    %279 = vmatpush1.bf16.msra.mxu0 %v177
    %280 = vmatprep.subr.bf16.mxu0 %v182
    %281 = vmatpush1.bf16.msra.mxu0 %v181
    %282 = vmatprep.subr.bf16.mxu0 %v186
    %283 = vmatpush1.bf16.msra.mxu0 %v185
    %284 = vmatprep.subr.bf16.mxu0 %v190
    %285 = vmatpush1.bf16.msra.mxu0 %v189
    %286 = vmatprep.subr.bf16.mxu0 %v194
    %287 = vmatpush1.bf16.msra.mxu0 %v193
    %288 = vmatprep.subr.bf16.mxu0 %v198
    %289 = vmatpush1.bf16.msra.mxu0 %v197
    %290 = vmatprep.subr.bf16.mxu0 %v202
    %291 = vmatpush1.bf16.msra.mxu0 %v201
    %292 = vmatprep.subr.bf16.mxu0 0
    %293 = vmatpush1.bf16.msra.mxu0 0
    %294 = vmatprep.subr.bf16.mxu0 0
    %295 = vmatpush1.bf16.msra.mxu0 0
    %296 = vmatprep.subr.bf16.mxu0 0
    %297 = vmatpush1.bf16.msra.mxu0 0
    %298 = vmatprep.subr.bf16.mxu0 0
    %299 = vmatpush1.bf16.msra.mxu0 0
    %300 = vmatprep.subr.bf16.mxu0 0
    %301 = vmatpush1.bf16.msra.mxu0 0
    %302 = vmatprep.subr.bf16.mxu0 0
    %303 = vmatpush1.bf16.msra.mxu0 0
    %304 = vmatprep.subr.bf16.mxu0 0
    %305 = vmatpush1.bf16.msra.mxu0 0
    %306 = vmatprep.subr.bf16.mxu0 0
    %307 = vmatpush1.bf16.msra.mxu0 0
    %308 = vmatprep.mubr.bf16.mxu0 0
    %309 = vmatmul.mubr.bf16.gmra.mrb[0].mxu0 %v42
    %v310 = vpop.f32.mrb[0].mxu0
    %v311 = vadd.f32 0.0, %v310
    %v312 = vpop.f32.mrb[0].mxu0
    %v313 = vadd.f32 0.0, %v312
    %v314 = vpop.f32.mrb[0].mxu0
    %v315 = vpop.f32.mrb[0].mxu0
    %316 = vdwg.mxu0
    %v317 = vadd.f32 %v270, %v272
    %v318 = vadd.f32 %v317, %v311
    %v319 = vadd.f32 %v318, %v313
    %v320 = vld [vmem:[%s2] sm:$0x1]
    %v322 = vlaneseq
    %v323 = vshrl.u32 %v322, 7
    %v324 = vsub.s32 0, %v323
    %v325 = vrot.slane %v320, %v324
    %v327 = vadd.f32 %v319, %v325
    %v328 = vmul.f32 %v327, 0.25
    %329 = vst [vmem:[#allocation7] sm:$0xff] %v328
    // Predicated region
    $region22: #{tpu_custom_call.1} parent=1 // pred_check
      _
    $region23: #{tpu_custom_call.1} parent=1 // pred_check_branch
      %331 = sbr.rel (0) target = $region25
    $region24: #{tpu_custom_call.1} parent=1 // pred_region
      %s333 = ssub.s32 128, 128
      %334 = vsyncadd [#allocation4], %s333
      %s336 = sshll.u32 [#allocation7], 4
      %s337 = int_to_ptr.vmem [resolvable:$true] %s336
      %339 = dma.vmem_to_hbm [thread:$0]  %s337, 128, %s3, [#allocation4]
    $region25: #{tpu_custom_call.1} parent=1 // pred_fallthru
      _
    // Predicated region
    $region26: #{tpu_custom_call.1} parent=1 // pred_check
      _
    $region27: #{tpu_custom_call.1} parent=1 // pred_check_branch
      %341 = sbr.rel (0) target = $region29
    $region28: #{tpu_custom_call.1} parent=1 // pred_region
      %342 = dma.done [#allocation4], 128
    $region29: #{tpu_custom_call.1} parent=1 // pred_fallthru
      _
    %343 = vsyncpa [#allocation3], 1
    %344 = vsyncpa [#allocation6], 1
    %345 = vsyncpa [#allocation4], 1

</llo_original>
